<compile_context>
chip_gen: v5e
topology: v5e:2x2
jax: 0.10.0
libtpu: 0.0.40
codegen_flags: <defaults>
</compile_context>

<pallas_src>
from functools import partial

import numpy as np
import jax
import jax.numpy as jnp
from jax.experimental import pallas as pl
from jax.experimental.pallas import tpu as pltpu


_LANE = 128          # lane width of the dense (rows, 128) pair layout
_BLOCK_ROWS = 2048   # rows per grid step -> 2048*128 = 256K pairs (~4 MiB/step)


def _round_up(a: int, b: int) -> int:
    return ((a + b - 1) // b) * b


# ----------------------------------------------------------------------------
# Pallas kernel: rij = sqrt(x^2 + y^2 + z^2), fully dense (S, 128) blocks
# ----------------------------------------------------------------------------
def _rij_kernel(x_ref, o_ref):
    # x_ref: (3, S, 128) float32 block; o_ref: (S, 128) float32 block.
    x0 = x_ref[0]
    x1 = x_ref[1]
    x2 = x_ref[2]
    # Unrolled VPU adds (no cross-lane / cross-sublane reduce); sqrt -> EUP.
    o_ref[...] = jnp.sqrt(x0 * x0 + x1 * x1 + x2 * x2)


def _compute_rij(Rij: jnp.ndarray) -> jnp.ndarray:
    """rij = ||Rij||_2 of an (N, 3) array via a dense-layout Pallas kernel."""
    N = Rij.shape[0]
    M = pl.cdiv(N, _LANE)            # rows of the (M, 128) pair grid
    Np = M * _LANE

    # TODO(synk): this transpose+pad is one extra fused HBM pass; the upstream
    # producer should ideally emit Rij in SoA (3, N) layout so the kernel can
    # consume it directly at the 16 B/pair minimum.
    x = jnp.transpose(Rij.astype(jnp.float32))        # (3, N)
    if Np != N:
        x = jnp.pad(x, ((0, 0), (0, Np - N)))
    x3 = x.reshape(3, M, _LANE)                       # free (bitcast) reshape

    # Rows per block: multiple of 8 (or the full extent), large (up to 256K
    # pairs / ~8 MiB double-buffered VMEM), and >= 2 grid steps whenever
    # possible so v7x can shard the parallel axis over both TensorCores.
    if M <= 8:
        S = M                                         # single full-extent block
    else:
        S = min(_BLOCK_ROWS, max(8, _round_up((M + 1) // 2, 8)))
    grid = pl.cdiv(M, S)

    rij_p = pl.pallas_call(
        _rij_kernel,
        out_shape=jax.ShapeDtypeStruct((M, _LANE), jnp.float32),
        grid=(grid,),
        in_specs=[pl.BlockSpec((3, S, _LANE), lambda i: (0, i, 0))],
        out_specs=pl.BlockSpec((S, _LANE), lambda i: (i, 0)),
        compiler_params=pltpu.CompilerParams(
            dimension_semantics=("parallel",),        # independent blocks
        ),
    )(x3)

    # Slice the padding off BEFORE the cutoff mask: padded lanes give rij = 0,
    # which would otherwise pass the `<= cutoff` test.
    return rij_p.reshape(Np)[:N]


# ----------------------------------------------------------------------------
# Single jitted dispatch: kernel + mask + device-side static-size compaction
# ----------------------------------------------------------------------------
@partial(jax.jit, static_argnames=("cutoff",))
def _rij_and_compact(Rij, idx_i, idx_j, *, cutoff):
    N = Rij.shape[0]
    rij = _compute_rij(Rij)                        # Pallas kernel
    mask = rij <= jnp.float32(cutoff)              # matches torch's `<=`
    n_short = jnp.sum(mask.astype(jnp.int32))
    # Static-size compaction on device (ascending order == torch.nonzero order).
    (cidx,) = jnp.nonzero(mask, size=N, fill_value=0)
    cidx = cidx.astype(jnp.int32)
    return rij, n_short, Rij[cidx], idx_i[cidx], idx_j[cidx]


# ----------------------------------------------------------------------------
# FilterShortRange forward (dict-in / dict-out, matching the PyTorch module)
# ----------------------------------------------------------------------------
def filter_short_range(inputs: dict, short_range_cutoff: float) -> dict:
    idx_i = inputs["idx_i"]
    idx_j = inputs["idx_j"]
    Rij = inputs["Rij"]

    out = dict(inputs)
    out["Rij_lr"] = Rij
    out["idx_i_lr"] = idx_i
    out["idx_j_lr"] = idx_j

    N = Rij.shape[0]
    if N == 0:                                     # no pairs: nothing to filter
        out["Rij"] = Rij
        out["idx_i"] = idx_i
        out["idx_j"] = idx_j
        out["rij"] = jnp.zeros((0,), jnp.float32)
        return out

    rij, n_short, Rij_sr, idx_i_sr, idx_j_sr = _rij_and_compact(
        Rij, idx_i, idx_j, cutoff=float(short_range_cutoff)
    )

    # TODO(synk): torch.nonzero returns a data-dependent (dynamic) shape, so a
    # single 4-byte count must cross the host boundary to produce exactly-sized
    # outputs.  Device-side consumers should instead keep the static-size
    # compacted arrays (valid prefix of length n_short) to stay asynchronous /
    # traceable under an outer jit or scan.
    n = int(n_short)

    out["Rij"] = Rij_sr[:n]
    out["idx_i"] = idx_i_sr[:n]
    out["idx_j"] = idx_j_sr[:n]
    out["rij"] = rij  # expose kernel output for verification
    return out


# ----------------------------------------------------------------------------
# Demo / self-check
# ----------------------------------------------------------------------------
if __name__ == "__main__":
    short_range_cutoff = 3.0   # module hyperparameter (deterministic, in-script)
    n_atoms = 64

    key = jax.random.PRNGKey(0)

    # Two small cases: one non-multiple-of-128 (padding path, single block) and
    # one larger one that exercises the multi-block / ragged-last-block path.
    for n_pairs in (300, 5000):
        key, k1, k2, k3 = jax.random.split(key, 4)
        Rij = jax.random.normal(k1, (n_pairs, 3), dtype=jnp.float32) * 2.5
        idx_i = jax.random.randint(k2, (n_pairs,), 0, n_atoms, dtype=jnp.int32)
        idx_j = jax.random.randint(k3, (n_pairs,), 0, n_atoms, dtype=jnp.int32)

        inputs = {"Rij": Rij, "idx_i": idx_i, "idx_j": idx_j}

        out = filter_short_range(inputs, short_range_cutoff)
        jax.block_until_ready(out["Rij"])
        jax.block_until_ready(out["rij"])

        # Reference check against plain JAX (same semantics as the torch module).
        rij_ref = jnp.linalg.norm(Rij, axis=-1)
        cidx_ref = np.nonzero(np.asarray(rij_ref <= short_range_cutoff))[0]

        np.testing.assert_allclose(
            np.asarray(out["rij"]), np.asarray(rij_ref), rtol=1e-5, atol=1e-5
        )
        np.testing.assert_array_equal(np.asarray(out["idx_i"]),
                                      np.asarray(idx_i[cidx_ref]))
        np.testing.assert_array_equal(np.asarray(out["idx_j"]),
                                      np.asarray(idx_j[cidx_ref]))
        np.testing.assert_allclose(np.asarray(out["Rij"]),
                                   np.asarray(Rij[cidx_ref]),
                                   rtol=1e-6, atol=1e-6)
        np.testing.assert_allclose(np.asarray(out["Rij_lr"]), np.asarray(Rij))
        np.testing.assert_array_equal(np.asarray(out["idx_i_lr"]),
                                      np.asarray(idx_i))
        np.testing.assert_array_equal(np.asarray(out["idx_j_lr"]),
                                      np.asarray(idx_j))

    print("KERNEL_OK")
</pallas_src>

<mosaic_0001>
module attributes {stable_mosaic.version = 11 : i64} {
  func.func @_rij_kernel(%arg0: i32, %arg1: memref<3x3x128xf32, #tpu.memory_space<vmem>>, %arg2: memref<3x128xf32, #tpu.memory_space<vmem>>) attributes {dimension_semantics = [#tpu.dimension_semantics<parallel>], iteration_bounds = array<i64: 1>, scalar_prefetch = 0 : i64, scratch_operands = 0 : i64, tpu.core_type = #tpu.core_type<tc>, window_params = [{transform_indices = @transform_0, window_bounds = array<i64: 3, 3, 128>}, {transform_indices = @transform_1, window_bounds = array<i64: 3, 128>}]} {
    %c0 = arith.constant 0 : index
    %c0_0 = arith.constant 0 : index
    %c0_1 = arith.constant 0 : index
    %0 = vector.load %arg1[%c0, %c0_0, %c0_1] : memref<3x3x128xf32, #tpu.memory_space<vmem>>, vector<1x3x128xf32>
    %1 = vector.shape_cast %0 : vector<1x3x128xf32> to vector<3x128xf32>
    %c1 = arith.constant 1 : index
    %c0_2 = arith.constant 0 : index
    %c0_3 = arith.constant 0 : index
    %2 = vector.load %arg1[%c1, %c0_2, %c0_3] : memref<3x3x128xf32, #tpu.memory_space<vmem>>, vector<1x3x128xf32>
    %3 = vector.shape_cast %2 : vector<1x3x128xf32> to vector<3x128xf32>
    %c2 = arith.constant 2 : index
    %c0_4 = arith.constant 0 : index
    %c0_5 = arith.constant 0 : index
    %4 = vector.load %arg1[%c2, %c0_4, %c0_5] : memref<3x3x128xf32, #tpu.memory_space<vmem>>, vector<1x3x128xf32>
    %5 = vector.shape_cast %4 : vector<1x3x128xf32> to vector<3x128xf32>
    %6 = arith.mulf %1, %1 : vector<3x128xf32>
    %7 = arith.mulf %3, %3 : vector<3x128xf32>
    %8 = arith.addf %6, %7 : vector<3x128xf32>
    %9 = arith.mulf %5, %5 : vector<3x128xf32>
    %10 = arith.addf %8, %9 : vector<3x128xf32>
    %11 = math.sqrt %10 : vector<3x128xf32>
    %c0_6 = arith.constant 0 : index
    %c0_7 = arith.constant 0 : index
    %12 = vector.load %arg2[%c0_6, %c0_7] : memref<3x128xf32, #tpu.memory_space<vmem>>, vector<3x128xf32>
    tpu.vector_store %arg2[%c0_6, %c0_7], %11 {strides = array<i32>} : memref<3x128xf32, #tpu.memory_space<vmem>>, vector<3x128xf32>,
    return
  }
  func.func @transform_0(%arg0: i32) -> (i32, i32, i32) {
    %c0_i32 = arith.constant 0 : i32
    %c0_i32_0 = arith.constant 0 : i32
    %c0_i32_1 = arith.constant 0 : i32
    return %c0_i32, %arg0, %c0_i32_0 : i32, i32, i32
  }
  func.func @transform_1(%arg0: i32) -> (i32, i32) {
    %c0_i32 = arith.constant 0 : i32
    %c0_i32_0 = arith.constant 0 : i32
    return %arg0, %c0_i32 : i32, i32
  }
}

</mosaic_0001>

<llo_original>
// kernel: _rij_and_compact.1
$region0: #{_rij_and_compact.1}
  #allocation0 [shape = 'u32[]', space=smem, size = 0x4, offset = 0x4, fixed_abs, tag = 'smem constant byte address 0x4 - core index']
  #allocation1 [shape = 'u32[72,128]{1,0:T(1,128)}', space=vmem, size = 0x9000, scoped, tag = 'internal scratch']
  %s0 = inlined_call_operand.vmem [shape: f32[3,3,128], index: 0, kind: input, shape index: {}]
  %s1 = inlined_call_operand.vmem [shape: f32[3,128], index: 1, kind: output, shape index: {}]
  %s2 = sld [smem:[#allocation0]]
  $region14: #{_rij_and_compact.1} parent=0
    _
  %s4 = ssub.s32 1, %s2
  %s5 = scalar_select 0, %s4, %s2
  // Predicated region
  $region2: #{_rij_and_compact.1} parent=0 // pred_check
    _
  $region3: #{_rij_and_compact.1} parent=0 // pred_check_branch
    %7 = sbr.rel (0) target = $region5
  $region4: #{_rij_and_compact.1} parent=0 // pred_region
    _
  $region5: #{_rij_and_compact.1} parent=0 // pred_fallthru
    _
  %v8 = vld [vmem:[%s0] sm:$0x7]
  %s9 = scalar_lea.vmem %s0, 4
  %v10 = vld [vmem:[%s9] sm:$0x7]
  %s11 = scalar_lea.vmem %s0, 8
  %v12 = vld [vmem:[%s11] sm:$0x7]
  %v13 = vmul.f32 %v8, %v8
  %v14 = vmul.f32 %v10, %v10
  %v15 = vadd.f32 %v13, %v14
  %v16 = vmul.f32 %v12, %v12
  %v17 = vadd.f32 %v15, %v16
  %v18 = vrsqrt.pop %v17
  %v19 = vmul.f32 %v18, %v17
  %v20 = vmul.f32 %v19, %v18
  %v21 = vmul.f32 0.5, %v20
  %v22 = vsub.f32 1.5, %v21
  %v23 = vmul.f32 %v18, %v22
  %v24 = vmul.f32 %v17, %v23
  %vm25 = vcmp.eq.f32.partialorder %v17, inf
  %v26 = vsel %vm25, %v17, %v24
  %vm27 = vcmp.eq.f32.partialorder %v17, 0.0
  %v28 = vand.u32 %v17, 2147483648
  %v29 = vsel %vm27, %v28, %v26
  %30 = vst [vmem:[%s1] sm:$0x7] %v29
  // Predicated region
  $region6: #{_rij_and_compact.1} parent=0 // pred_check
    _
  $region7: #{_rij_and_compact.1} parent=0 // pred_check_branch
    %32 = sbr.rel (0) target = $region9
  $region8: #{_rij_and_compact.1} parent=0 // pred_region
    _
  $region9: #{_rij_and_compact.1} parent=0 // pred_fallthru
    _
  // Predicated region
  $region10: #{_rij_and_compact.1} parent=0 // pred_check
    _
  $region11: #{_rij_and_compact.1} parent=0 // pred_check_branch
    %34 = sbr.rel (0) target = $region13
  $region12: #{_rij_and_compact.1} parent=0 // pred_region
    _
  $region13: #{_rij_and_compact.1} parent=0 // pred_fallthru
    _

</llo_original>
